<compile_context>
chip_gen: v7x
topology: tpu7x:2x2x1
jax: 0.10.0
libtpu: 0.0.40
codegen_flags: <defaults>
</compile_context>

<pallas_src>
import numpy as np

import jax
import jax.numpy as jnp
from jax.experimental import pallas as pl
from jax.experimental.pallas import tpu as pltpu


# ----------------------------------------------------------------------------
# helpers
# ----------------------------------------------------------------------------
def _round_up(x, m):
    return ((x + m - 1) // m) * m


def _pick_halo(lb, need):
    """Smallest 128*2^k width that divides `lb` and covers `need` lanes."""
    h = 128
    while h < lb and (h < need or lb % h != 0):
        h *= 2
    return min(h, lb)


def _vmem_limit_bytes(est_bytes):
    cap = 128 * 1024 * 1024
    try:
        info = pltpu.get_tpu_info()
        cap = int(getattr(info, "vmem_capacity_bytes", cap))
    except Exception:
        pass
    budget = int(cap * 0.85)          # ~108 MiB on v5e/v6e, ~54 MiB on v7x
    return int(min(budget, max(4 * est_bytes, 16 * 1024 * 1024)))


# ----------------------------------------------------------------------------
# Fused TemporalBlock kernel (one (batch, L-block) tile per grid step)
# ----------------------------------------------------------------------------
def _make_block_kernel(C_in, C_out, L, Lb, Hb, d, K, n_lblk, has_down):
    pad = (K - 1) * d
    Wg = Lb + pad                      # conv1 columns needed for this block

    def kernel(*refs):
        if has_down:
            (x_ref, xh_ref, w1_ref, b1_ref, w2_ref, b2_ref,
             wd_ref, bd_ref, out_ref) = refs
        else:
            (x_ref, xh_ref, w1_ref, b1_ref, w2_ref, b2_ref, out_ref) = refs

        li = pl.program_id(1)

        # Trailing all-zero block: keeps the "columns >= L are zero" invariant
        # so the next layer's halo reads are physically zero.
        @pl.when(li == n_lblk)
        def _():
            out_ref[...] = jnp.zeros_like(out_ref)

        @pl.when(li < n_lblk)
        def _():
            cdt = out_ref.dtype
            c0 = li * Lb

            # ---- hoisted loads (issued once per grid step) ------------------
            b1 = b1_ref[...]                          # (C_out, 1) f32
            b2 = b2_ref[...]                          # (C_out, 1) f32
            x_cur = x_ref[0, :, :]                    # (C_in, Lb)   bf16
            xw = jnp.concatenate([x_cur, xh_ref[0, :, :]], axis=1)  # (C_in, Lb+Hb)

            # ---- conv1 (dilated) + bias + relu over [c0, c0+Lb+pad) ---------
            # K tap matmuls, lane-sliced from one x window, f32 accumulation.
            acc1 = jnp.dot(w1_ref[0, :, :], xw[:, 0:Wg],
                           preferred_element_type=jnp.float32)
            for j in range(1, K):
                acc1 = acc1 + jnp.dot(w1_ref[j, :, :],
                                      xw[:, j * d:j * d + Wg],
                                      preferred_element_type=jnp.float32)
            g = jnp.maximum(acc1 + b1, 0.0)
            # conv2's zero right-padding: g at global column >= L is zero.
            col_g = c0 + jax.lax.broadcasted_iota(jnp.int32, (C_out, Wg), 1)
            g = jnp.where(col_g < L, g, 0.0).astype(cdt)

            # ---- conv2 (dilated) + bias + relu over [c0, c0+Lb) -------------
            acc2 = jnp.dot(w2_ref[0, :, :], g[:, 0:Lb],
                           preferred_element_type=jnp.float32)
            for j in range(1, K):
                acc2 = acc2 + jnp.dot(w2_ref[j, :, :],
                                      g[:, j * d:j * d + Lb],
                                      preferred_element_type=jnp.float32)
            o2 = jnp.maximum(acc2 + b2, 0.0)

            # ---- residual (relu precedes the add -> cannot fold into conv2),
            #      final relu, and zero-masking of columns >= L ---------------
            if has_down:
                res = jnp.dot(wd_ref[...], x_cur,
                              preferred_element_type=jnp.float32) + bd_ref[...]
            else:
                res = x_cur.astype(jnp.float32)
            out = jnp.maximum(o2 + res, 0.0)

            col_o = c0 + jax.lax.broadcasted_iota(jnp.int32, (C_out, Lb), 1)
            out_ref[0, :, :] = jnp.where(col_o < L, out, 0.0).astype(cdt)

    return kernel


def temporal_block(x_pad, w1, b1, w2, b2, wd, bd, *, L, kernel_size, dilation,
                   Lb, compute_dtype=jnp.bfloat16):
    """One TemporalBlock on a zero-right-padded sequence.

    x_pad: (N, C_in, L_x) with L_x = L_pad + Lb (L_pad a multiple of Lb) and
    all columns >= L equal to zero.  Returns (N, C_out, L_x) with the same
    invariant, so blocks chain with no HBM-side re-padding.
    """
    N, C_in, L_x = x_pad.shape
    K = kernel_size
    d = dilation
    pad = (K - 1) * d
    C_out = w1.shape[-1]
    has_down = wd is not None

    n_lblk = L_x // Lb - 1
    Hb = _pick_halo(Lb, 2 * pad)
    assert 2 * pad <= Hb <= Lb and Lb % Hb == 0 and L_x % Lb == 0

    # per-tap weights: (K, C_in, C_out) -> (K, C_out, C_in)
    w1t = jnp.transpose(w1, (0, 2, 1)).astype(compute_dtype)
    w2t = jnp.transpose(w2, (0, 2, 1)).astype(compute_dtype)
    b1c = b1.reshape(C_out, 1).astype(jnp.float32)
    b2c = b2.reshape(C_out, 1).astype(jnp.float32)

    halo_ratio = Lb // Hb
    halo_last = L_x // Hb - 1

    in_specs = [
        pl.BlockSpec((1, C_in, Lb), lambda n, l: (n, 0, l)),
        pl.BlockSpec((1, C_in, Hb),
                     lambda n, l: (n, 0, jnp.minimum((l + 1) * halo_ratio,
                                                     halo_last))),
        pl.BlockSpec((K, C_out, C_in), lambda n, l: (0, 0, 0)),
        pl.BlockSpec((C_out, 1), lambda n, l: (0, 0)),
        pl.BlockSpec((K, C_out, C_out), lambda n, l: (0, 0, 0)),
        pl.BlockSpec((C_out, 1), lambda n, l: (0, 0)),
    ]
    args = [x_pad, x_pad, w1t, b1c, w2t, b2c]
    if has_down:
        wdt = jnp.transpose(wd, (1, 0)).astype(compute_dtype)   # (C_out, C_in)
        bdc = bd.reshape(C_out, 1).astype(jnp.float32)
        args += [wdt, bdc]
        in_specs += [
            pl.BlockSpec((C_out, C_in), lambda n, l: (0, 0)),
            pl.BlockSpec((C_out, 1), lambda n, l: (0, 0)),
        ]

    kernel = _make_block_kernel(C_in, C_out, L, Lb, Hb, d, K, n_lblk, has_down)

    itemsize = np.dtype(compute_dtype).itemsize
    flops = 2 * N * n_lblk * (K * C_in * C_out * (Lb + pad)
                              + K * C_out * C_out * Lb
                              + (C_in * C_out * Lb if has_down else 0))
    param_bytes = sum(int(a.size) * a.dtype.itemsize for a in args[2:])
    bytes_accessed = int(N * (C_in * (L_x + (n_lblk + 1) * Hb)
                              + C_out * L_x) * itemsize + param_bytes)
    block_bytes = (C_in * (Lb + Hb) + C_out * Lb) * itemsize
    val_bytes = 4 * C_out * (3 * Lb + 2 * (Lb + pad))            # f32 temps
    vmem_est = 2 * (block_bytes + param_bytes) + val_bytes

    return pl.pallas_call(
        kernel,
        out_shape=jax.ShapeDtypeStruct((N, C_out, L_x), compute_dtype),
        grid_spec=pltpu.PrefetchScalarGridSpec(
            num_scalar_prefetch=0,
            grid=(N, n_lblk + 1),
            in_specs=in_specs,
            out_specs=pl.BlockSpec((1, C_out, Lb), lambda n, l: (n, 0, l)),
        ),
        compiler_params=pltpu.CompilerParams(
            dimension_semantics=("parallel", "parallel"),
            vmem_limit_bytes=_vmem_limit_bytes(vmem_est)),
        cost_estimate=pl.CostEstimate(flops=flops, transcendentals=0,
                                      bytes_accessed=bytes_accessed),
    )(*args)


# ----------------------------------------------------------------------------
# TemporalConvNet wrapper (NCL in, NCL out — same as PyTorch)
# ----------------------------------------------------------------------------
def tcn_forward(x_ncl, params, kernel_size, compute_dtype=jnp.bfloat16):
    N, _, L = x_ncl.shape
    pad_max = (kernel_size - 1) * max(p["dilation"] for p in params)

    # L-block width: multiple of 128, >= 2*pad_max (so one halo block covers
    # every layer's receptive-field overhang), grown while it adds no padding
    # waste, capped at 512 to bound per-step value footprint.
    Lb = 128
    while Lb < 2 * pad_max:
        Lb *= 2
    while Lb < 512 and _round_up(L, 2 * Lb) == _round_up(L, Lb):
        Lb *= 2

    L_pad = _round_up(L, Lb)
    L_x = L_pad + Lb          # one extra all-zero block = halo of the last block

    h = jnp.pad(x_ncl.astype(compute_dtype), ((0, 0), (0, 0), (0, L_x - L)))
    for p in params:
        h = temporal_block(h, p["w1"], p["b1"], p["w2"], p["b2"],
                           p["wd"], p["bd"], L=L, kernel_size=kernel_size,
                           dilation=p["dilation"], Lb=Lb,
                           compute_dtype=compute_dtype)
    return h[:, :, :L].astype(jnp.float32)


# ----------------------------------------------------------------------------
# Deterministic parameter init (kaiming-normal weights, PyTorch-style bias)
# ----------------------------------------------------------------------------
def init_tcn_params(key, num_inputs, num_channels, kernel_size):
    params = []
    for i, c_out in enumerate(num_channels):
        c_in = num_inputs if i == 0 else num_channels[i - 1]
        d = 2 ** i
        key, k1, k2, k3, k4, k5, k6 = jax.random.split(key, 7)

        fan1 = c_in * kernel_size
        w1 = jax.random.normal(k1, (kernel_size, c_in, c_out),
                               jnp.float32) * np.sqrt(2.0 / fan1)
        b1 = jax.random.uniform(k2, (c_out,), jnp.float32,
                                -1.0 / np.sqrt(fan1), 1.0 / np.sqrt(fan1))

        fan2 = c_out * kernel_size
        w2 = jax.random.normal(k3, (kernel_size, c_out, c_out),
                               jnp.float32) * np.sqrt(2.0 / fan2)
        b2 = jax.random.uniform(k4, (c_out,), jnp.float32,
                                -1.0 / np.sqrt(fan2), 1.0 / np.sqrt(fan2))

        if c_in != c_out:
            wd = jax.random.normal(k5, (c_in, c_out),
                                   jnp.float32) * np.sqrt(2.0 / c_in)
            bd = jax.random.uniform(k6, (c_out,), jnp.float32,
                                    -1.0 / np.sqrt(c_in), 1.0 / np.sqrt(c_in))
        else:
            wd, bd = None, None

        params.append(dict(w1=w1, b1=b1, w2=w2, b2=b2, wd=wd, bd=bd,
                           dilation=d))
    return params


# ----------------------------------------------------------------------------
# Pure-JAX reference (faithful to the PyTorch module in eval mode, mirroring
# the kernel's bf16-operand / f32-accumulate quantization points)
# ----------------------------------------------------------------------------
def _ref_conv1d(x_ncl, w_kio, b, pad, d, compute_dtype):
    w_oih = jnp.transpose(w_kio, (2, 1, 0)).astype(compute_dtype)
    y = jax.lax.conv_general_dilated(
        x_ncl.astype(compute_dtype), w_oih, window_strides=(1,),
        padding=[(pad, pad)], rhs_dilation=(d,),
        dimension_numbers=("NCH", "OIH", "NCH"),
        preferred_element_type=jnp.float32)
    return y + b.astype(jnp.float32)[None, :, None]


def tcn_ref(x_ncl, params, kernel_size, compute_dtype=jnp.bfloat16):
    x = x_ncl.astype(jnp.float32)
    for p in params:
        d = p["dilation"]
        pad = (kernel_size - 1) * d
        xq = x.astype(compute_dtype).astype(jnp.float32)
        out = jax.nn.relu(_ref_conv1d(xq, p["w1"], p["b1"], pad, d,
                                      compute_dtype))
        out = jax.nn.relu(_ref_conv1d(out, p["w2"], p["b2"], pad, d,
                                      compute_dtype))
        if p["wd"] is not None:
            wd_oih = jnp.transpose(p["wd"], (1, 0))[:, :, None].astype(
                compute_dtype)
            res = jax.lax.conv_general_dilated(
                xq.astype(compute_dtype), wd_oih, window_strides=(1,),
                padding=[(0, 0)], dimension_numbers=("NCH", "OIH", "NCH"),
                preferred_element_type=jnp.float32)
            res = res + p["bd"][None, :, None]
        else:
            res = xq
        out_trim = out[:, :, 2 * pad:]
        res_trim = res[:, :, :out_trim.shape[2]]
        x = jax.nn.relu(out_trim + res_trim)
        # block outputs are stored in compute_dtype in the kernel path
        x = x.astype(compute_dtype).astype(jnp.float32)
    return x


# ----------------------------------------------------------------------------
if __name__ == "__main__":
    key = jax.random.PRNGKey(0)

    # Small shapes consistent with the module: TCN on (batch, features, seq).
    N, num_inputs, L = 2, 4, 16
    num_channels = [8, 8]
    kernel_size = 2

    key, xk, pk = jax.random.split(key, 3)
    x = jax.random.normal(xk, (N, num_inputs, L), jnp.float32)   # NCL layout
    params = init_tcn_params(pk, num_inputs, num_channels, kernel_size)

    y = jax.block_until_ready(tcn_forward(x, params, kernel_size))
    y_ref = jax.block_until_ready(tcn_ref(x, params, kernel_size))

    np.testing.assert_allclose(np.asarray(y), np.asarray(y_ref),
                               rtol=2e-2, atol=2e-2)

    print("KERNEL_OK")
</pallas_src>

<mosaic_0001>
module attributes {stable_mosaic.version = 11 : i64} {
  func.func @kernel(%arg0: i32, %arg1: i32, %arg2: memref<1x4x128xbf16, #tpu.memory_space<vmem>>, %arg3: memref<1x4x128xbf16, #tpu.memory_space<vmem>>, %arg4: memref<2x8x4xbf16, #tpu.memory_space<vmem>>, %arg5: memref<8x1xf32, #tpu.memory_space<vmem>>, %arg6: memref<2x8x8xbf16, #tpu.memory_space<vmem>>, %arg7: memref<8x1xf32, #tpu.memory_space<vmem>>, %arg8: memref<8x4xbf16, #tpu.memory_space<vmem>>, %arg9: memref<8x1xf32, #tpu.memory_space<vmem>>, %arg10: memref<1x8x128xbf16, #tpu.memory_space<vmem>>) attributes {dimension_semantics = [#tpu.dimension_semantics<parallel>, #tpu.dimension_semantics<parallel>], iteration_bounds = array<i64: 2, 2>, scalar_prefetch = 0 : i64, scratch_operands = 0 : i64, tpu.core_type = #tpu.core_type<tc>, window_params = [{transform_indices = @transform_0, window_bounds = array<i64: 1, 4, 128>}, {transform_indices = @transform_1, window_bounds = array<i64: 1, 4, 128>}, {pipeline_mode = #tpu.pipeline_mode<synchronous>, transform_indices = @transform_2, window_bounds = array<i64: 2, 8, 4>}, {pipeline_mode = #tpu.pipeline_mode<synchronous>, transform_indices = @transform_3, window_bounds = array<i64: 8, 1>}, {pipeline_mode = #tpu.pipeline_mode<synchronous>, transform_indices = @transform_4, window_bounds = array<i64: 2, 8, 8>}, {pipeline_mode = #tpu.pipeline_mode<synchronous>, transform_indices = @transform_5, window_bounds = array<i64: 8, 1>}, {pipeline_mode = #tpu.pipeline_mode<synchronous>, transform_indices = @transform_6, window_bounds = array<i64: 8, 4>}, {pipeline_mode = #tpu.pipeline_mode<synchronous>, transform_indices = @transform_7, window_bounds = array<i64: 8, 1>}, {transform_indices = @transform_8, window_bounds = array<i64: 1, 8, 128>}]} {
    %c1_i32 = arith.constant 1 : i32
    %0 = arith.cmpi eq, %arg1, %c1_i32 : i32
    %1 = arith.extui %0 : i1 to i32
    %c0_i32 = arith.constant 0 : i32
    %2 = arith.cmpi ne, %1, %c0_i32 : i32
    scf.if %2 {
      %cst = arith.constant 0.000000e+00 : bf16
      %6 = vector.broadcast %cst : bf16 to vector<1x8x128xbf16>
      %c0 = arith.constant 0 : index
      %c0_2 = arith.constant 0 : index
      %c0_3 = arith.constant 0 : index
      %7 = vector.load %arg10[%c0, %c0_2, %c0_3] : memref<1x8x128xbf16, #tpu.memory_space<vmem>>, vector<1x8x128xbf16>
      tpu.vector_store %arg10[%c0, %c0_2, %c0_3], %6 {strides = array<i32>} : memref<1x8x128xbf16, #tpu.memory_space<vmem>>, vector<1x8x128xbf16>,
    } else {
    }
    %c1_i32_0 = arith.constant 1 : i32
    %3 = arith.cmpi slt, %arg1, %c1_i32_0 : i32
    %4 = arith.extui %3 : i1 to i32
    %c0_i32_1 = arith.constant 0 : i32
    %5 = arith.cmpi ne, %4, %c0_i32_1 : i32
    scf.if %5 {
      %c128_i32 = arith.constant 128 : i32
      %6 = arith.muli %arg1, %c128_i32 : i32
      %c0 = arith.constant 0 : index
      %c0_2 = arith.constant 0 : index
      %7 = vector.load %arg5[%c0, %c0_2] : memref<8x1xf32, #tpu.memory_space<vmem>>, vector<8x1xf32>
      %c0_3 = arith.constant 0 : index
      %c0_4 = arith.constant 0 : index
      %8 = vector.load %arg7[%c0_3, %c0_4] : memref<8x1xf32, #tpu.memory_space<vmem>>, vector<8x1xf32>
      %c0_5 = arith.constant 0 : index
      %c0_6 = arith.constant 0 : index
      %c0_7 = arith.constant 0 : index
      %9 = vector.load %arg2[%c0_5, %c0_6, %c0_7] : memref<1x4x128xbf16, #tpu.memory_space<vmem>>, vector<1x4x128xbf16>
      %10 = vector.shape_cast %9 : vector<1x4x128xbf16> to vector<4x128xbf16>
      %c0_8 = arith.constant 0 : index
      %c0_9 = arith.constant 0 : index
      %c0_10 = arith.constant 0 : index
      %11 = vector.load %arg3[%c0_8, %c0_9, %c0_10] : memref<1x4x128xbf16, #tpu.memory_space<vmem>>, vector<1x4x128xbf16>
      %12 = vector.shape_cast %11 : vector<1x4x128xbf16> to vector<4x128xbf16>
      %13 = tpu.concatenate %10, %12 in 1 : vector<4x128xbf16>, vector<4x128xbf16> -> vector<4x256xbf16>
      %c0_11 = arith.constant 0 : index
      %c0_12 = arith.constant 0 : index
      %c0_13 = arith.constant 0 : index
      %14 = vector.load %arg4[%c0_11, %c0_12, %c0_13] : memref<2x8x4xbf16, #tpu.memory_space<vmem>>, vector<1x8x4xbf16>
      %15 = vector.shape_cast %14 : vector<1x8x4xbf16> to vector<8x4xbf16>
      %16 = vector.extract_strided_slice %13 {offsets = [0, 0], sizes = [4, 129], strides = [1, 1]} : vector<4x256xbf16> to vector<4x129xbf16>
      %cst = arith.constant dense<0.000000e+00> : vector<8x129xf32>
      %17 = tpu.matmul %15, %16, %cst {dimension_numbers = #tpu.dot_dimension_numbers<[1], [0], [0], [1], [0, 0, 1, 1], [], []>} : vector<8x4xbf16>, vector<4x129xbf16>, vector<8x129xf32> -> vector<8x129xf32>
      %c1 = arith.constant 1 : index
      %c0_14 = arith.constant 0 : index
      %c0_15 = arith.constant 0 : index
      %18 = vector.load %arg4[%c1, %c0_14, %c0_15] : memref<2x8x4xbf16, #tpu.memory_space<vmem>>, vector<1x8x4xbf16>
      %19 = vector.shape_cast %18 : vector<1x8x4xbf16> to vector<8x4xbf16>
      %20 = vector.extract_strided_slice %13 {offsets = [0, 1], sizes = [4, 129], strides = [1, 1]} : vector<4x256xbf16> to vector<4x129xbf16>
      %cst_16 = arith.constant dense<0.000000e+00> : vector<8x129xf32>
      %21 = tpu.matmul %19, %20, %cst_16 {dimension_numbers = #tpu.dot_dimension_numbers<[1], [0], [0], [1], [0, 0, 1, 1], [], []>} : vector<8x4xbf16>, vector<4x129xbf16>, vector<8x129xf32> -> vector<8x129xf32>
      %22 = arith.addf %17, %21 : vector<8x129xf32>
      %23 = vector.broadcast %7 : vector<8x1xf32> to vector<8x129xf32>
      %24 = arith.addf %22, %23 : vector<8x129xf32>
      %cst_17 = arith.constant 0.000000e+00 : f32
      %25 = vector.broadcast %cst_17 : f32 to vector<8x129xf32>
      %26 = arith.maximumf %24, %25 : vector<8x129xf32>
      %27 = tpu.iota {dimensions = array<i32: 1>} : vector<8x129xi32>
      %28 = vector.broadcast %6 : i32 to vector<8x129xi32>
      %29 = arith.addi %28, %27 : vector<8x129xi32>
      %c16_i32 = arith.constant 16 : i32
      %30 = vector.broadcast %c16_i32 : i32 to vector<8x129xi32>
      %31 = arith.cmpi slt, %29, %30 : vector<8x129xi32>
      %cst_18 = arith.constant 0.000000e+00 : f32
      %32 = vector.broadcast %cst_18 : f32 to vector<8x129xf32>
      %33 = arith.select %31, %26, %32 : vector<8x129xi1>, vector<8x129xf32>
      %34 = arith.truncf %33 : vector<8x129xf32> to vector<8x129xbf16>
      %c0_19 = arith.constant 0 : index
      %c0_20 = arith.constant 0 : index
      %c0_21 = arith.constant 0 : index
      %35 = vector.load %arg6[%c0_19, %c0_20, %c0_21] : memref<2x8x8xbf16, #tpu.memory_space<vmem>>, vector<1x8x8xbf16>
      %36 = vector.shape_cast %35 : vector<1x8x8xbf16> to vector<8x8xbf16>
      %37 = vector.extract_strided_slice %34 {offsets = [0, 0], sizes = [8, 128], strides = [1, 1]} : vector<8x129xbf16> to vector<8x128xbf16>
      %cst_22 = arith.constant dense<0.000000e+00> : vector<8x128xf32>
      %38 = tpu.matmul %36, %37, %cst_22 {dimension_numbers = #tpu.dot_dimension_numbers<[1], [0], [0], [1], [0, 0, 1, 1], [], []>} : vector<8x8xbf16>, vector<8x128xbf16>, vector<8x128xf32> -> vector<8x128xf32>
      %c1_23 = arith.constant 1 : index
      %c0_24 = arith.constant 0 : index
      %c0_25 = arith.constant 0 : index
      %39 = vector.load %arg6[%c1_23, %c0_24, %c0_25] : memref<2x8x8xbf16, #tpu.memory_space<vmem>>, vector<1x8x8xbf16>
      %40 = vector.shape_cast %39 : vector<1x8x8xbf16> to vector<8x8xbf16>
      %41 = vector.extract_strided_slice %34 {offsets = [0, 1], sizes = [8, 128], strides = [1, 1]} : vector<8x129xbf16> to vector<8x128xbf16>
      %cst_26 = arith.constant dense<0.000000e+00> : vector<8x128xf32>
      %42 = tpu.matmul %40, %41, %cst_26 {dimension_numbers = #tpu.dot_dimension_numbers<[1], [0], [0], [1], [0, 0, 1, 1], [], []>} : vector<8x8xbf16>, vector<8x128xbf16>, vector<8x128xf32> -> vector<8x128xf32>
      %43 = arith.addf %38, %42 : vector<8x128xf32>
      %44 = vector.broadcast %8 : vector<8x1xf32> to vector<8x128xf32>
      %45 = arith.addf %43, %44 : vector<8x128xf32>
      %cst_27 = arith.constant 0.000000e+00 : f32
      %46 = vector.broadcast %cst_27 : f32 to vector<8x128xf32>
      %47 = arith.maximumf %45, %46 : vector<8x128xf32>
      %c0_28 = arith.constant 0 : index
      %c0_29 = arith.constant 0 : index
      %48 = vector.load %arg8[%c0_28, %c0_29] : memref<8x4xbf16, #tpu.memory_space<vmem>>, vector<8x4xbf16>
      %cst_30 = arith.constant dense<0.000000e+00> : vector<8x128xf32>
      %49 = tpu.matmul %48, %10, %cst_30 {dimension_numbers = #tpu.dot_dimension_numbers<[1], [0], [0], [1], [0, 0, 1, 1], [], []>} : vector<8x4xbf16>, vector<4x128xbf16>, vector<8x128xf32> -> vector<8x128xf32>
      %c0_31 = arith.constant 0 : index
      %c0_32 = arith.constant 0 : index
      %50 = vector.load %arg9[%c0_31, %c0_32] : memref<8x1xf32, #tpu.memory_space<vmem>>, vector<8x1xf32>
      %51 = vector.broadcast %50 : vector<8x1xf32> to vector<8x128xf32>
      %52 = arith.addf %49, %51 : vector<8x128xf32>
      %53 = arith.addf %47, %52 : vector<8x128xf32>
      %cst_33 = arith.constant 0.000000e+00 : f32
      %54 = vector.broadcast %cst_33 : f32 to vector<8x128xf32>
      %55 = arith.maximumf %53, %54 : vector<8x128xf32>
      %56 = tpu.iota {dimensions = array<i32: 1>} : vector<8x128xi32>
      %57 = vector.broadcast %6 : i32 to vector<8x128xi32>
      %58 = arith.addi %57, %56 : vector<8x128xi32>
      %c16_i32_34 = arith.constant 16 : i32
      %59 = vector.broadcast %c16_i32_34 : i32 to vector<8x128xi32>
      %60 = arith.cmpi slt, %58, %59 : vector<8x128xi32>
      %cst_35 = arith.constant 0.000000e+00 : f32
      %61 = vector.broadcast %cst_35 : f32 to vector<8x128xf32>
      %62 = arith.select %60, %55, %61 : vector<8x128xi1>, vector<8x128xf32>
      %63 = arith.truncf %62 : vector<8x128xf32> to vector<8x128xbf16>
      %c0_36 = arith.constant 0 : index
      %c0_37 = arith.constant 0 : index
      %c0_38 = arith.constant 0 : index
      %64 = vector.load %arg10[%c0_36, %c0_37, %c0_38] : memref<1x8x128xbf16, #tpu.memory_space<vmem>>, vector<1x8x128xbf16>
      %65 = vector.shape_cast %64 : vector<1x8x128xbf16> to vector<8x128xbf16>
      %66 = vector.shape_cast %63 : vector<8x128xbf16> to vector<1x8x128xbf16>
      tpu.vector_store %arg10[%c0_36, %c0_37, %c0_38], %66 {strides = array<i32>} : memref<1x8x128xbf16, #tpu.memory_space<vmem>>, vector<1x8x128xbf16>,
    } else {
    }
    return
  }
  func.func @transform_0(%arg0: i32, %arg1: i32) -> (i32, i32, i32) {
    %c0_i32 = arith.constant 0 : i32
    %c0_i32_0 = arith.constant 0 : i32
    return %arg0, %c0_i32, %arg1 : i32, i32, i32
  }
  func.func @transform_1(%arg0: i32, %arg1: i32) -> (i32, i32, i32) {
    %c1_i32 = arith.constant 1 : i32
    %0 = arith.addi %arg1, %c1_i32 : i32
    %c1_i32_0 = arith.constant 1 : i32
    %1 = arith.muli %0, %c1_i32_0 : i32
    %c1_i32_1 = arith.constant 1 : i32
    %2 = arith.minsi %1, %c1_i32_1 : i32
    %c0_i32 = arith.constant 0 : i32
    %c0_i32_2 = arith.constant 0 : i32
    return %arg0, %c0_i32, %2 : i32, i32, i32
  }
  func.func @transform_2(%arg0: i32, %arg1: i32) -> (i32, i32, i32) {
    %c0_i32 = arith.constant 0 : i32
    %c0_i32_0 = arith.constant 0 : i32
    %c0_i32_1 = arith.constant 0 : i32
    %c0_i32_2 = arith.constant 0 : i32
    return %c0_i32, %c0_i32_0, %c0_i32_1 : i32, i32, i32
  }
  func.func @transform_3(%arg0: i32, %arg1: i32) -> (i32, i32) {
    %c0_i32 = arith.constant 0 : i32
    %c0_i32_0 = arith.constant 0 : i32
    %c0_i32_1 = arith.constant 0 : i32
    return %c0_i32, %c0_i32_0 : i32, i32
  }
  func.func @transform_4(%arg0: i32, %arg1: i32) -> (i32, i32, i32) {
    %c0_i32 = arith.constant 0 : i32
    %c0_i32_0 = arith.constant 0 : i32
    %c0_i32_1 = arith.constant 0 : i32
    %c0_i32_2 = arith.constant 0 : i32
    return %c0_i32, %c0_i32_0, %c0_i32_1 : i32, i32, i32
  }
  func.func @transform_5(%arg0: i32, %arg1: i32) -> (i32, i32) {
    %c0_i32 = arith.constant 0 : i32
    %c0_i32_0 = arith.constant 0 : i32
    %c0_i32_1 = arith.constant 0 : i32
    return %c0_i32, %c0_i32_0 : i32, i32
  }
  func.func @transform_6(%arg0: i32, %arg1: i32) -> (i32, i32) {
    %c0_i32 = arith.constant 0 : i32
    %c0_i32_0 = arith.constant 0 : i32
    %c0_i32_1 = arith.constant 0 : i32
    return %c0_i32, %c0_i32_0 : i32, i32
  }
  func.func @transform_7(%arg0: i32, %arg1: i32) -> (i32, i32) {
    %c0_i32 = arith.constant 0 : i32
    %c0_i32_0 = arith.constant 0 : i32
    %c0_i32_1 = arith.constant 0 : i32
    return %c0_i32, %c0_i32_0 : i32, i32
  }
  func.func @transform_8(%arg0: i32, %arg1: i32) -> (i32, i32, i32) {
    %c0_i32 = arith.constant 0 : i32
    %c0_i32_0 = arith.constant 0 : i32
    return %arg0, %c0_i32, %arg1 : i32, i32, i32
  }
}

</mosaic_0001>

<llo_original>
// kernel: tpu_custom_call.1
$region0: #{tpu_custom_call.1}
  #allocation0 [shape = 'u32[]', space=smem, size = 0x4, offset = 0x4, fixed_abs, tag = 'smem constant byte address 0x4 - core index']
  #allocation1 [shape = 'u32[144,128]{1,0:T(1,128)}', space=vmem, size = 0x12000, scoped, tag = 'internal scratch']
  %s0 = inlined_call_operand.vmem [shape: bf16[2,4,256], index: 0, kind: input, shape index: {}]
  %s1 = inlined_call_operand.vmem [shape: bf16[2,4,256], index: 1, kind: input, shape index: {}]
  %s2 = inlined_call_operand.vmem [shape: bf16[2,8,4], index: 2, kind: input, shape index: {}]
  %s3 = inlined_call_operand.vmem [shape: f32[8,1], index: 3, kind: input, shape index: {}]
  %s4 = inlined_call_operand.vmem [shape: bf16[2,8,8], index: 4, kind: input, shape index: {}]
  %s5 = inlined_call_operand.vmem [shape: f32[8,1], index: 5, kind: input, shape index: {}]
  %s6 = inlined_call_operand.vmem [shape: bf16[8,4], index: 6, kind: input, shape index: {}]
  %s7 = inlined_call_operand.vmem [shape: f32[8,1], index: 7, kind: input, shape index: {}]
  %s8 = inlined_call_operand.hbm [shape: bf16[2,8,256], index: 8, kind: output, shape index: {}]
  %s9 = sld [smem:[#allocation0]]
  $region73: #{tpu_custom_call.1} parent=0
    _
  %s11 = ssub.s32 1, %s9
  %s12 = scalar_select 0, %s11, %s9
  $region1: #{tpu_custom_call.1} parent=0
    #allocation2 [shape = 'u8[4096]{0}', space=vmem, size = 0x1000, scoped, tag = 'output window, operand 0']
    #allocation3 [shape = 's32[2]{0}', space=sflag, size = 0x8, scoped, tag = 'scoped memory for tpu_custom_call.1']
    %13 = vsyncpa [#allocation3], 0
    %s14 = scalar_lea.sflag [#allocation3], 1
    %15 = vsyncpa %s14, 0
    loop: start=0, step=1, limit=6
    $region2: #{tpu_custom_call.1} parent=1 // loop_pre_header
      _
    $region3: #{tpu_custom_call.1} parent=1 // loop_header
      %s17 = sphi 0, %s21
      %p18 = scmp.ge.s32.totalorder %s17, 6
      %s24 = sphi 0, %s36
      %s25 = sphi 0, %s32
      %s26 = sphi 0, %s24
      %s27 = sphi 0, %s25
      %s28 = sphi 0, %s26
      %s29 = sphi 0, %s27
      %s41 = sphi 0, %s43
      %s44 = sphi 0, %s41
      %s45 = sphi 0, %s44
      %s61 = sphi 0, %s45
      %s75 = sphi 0, %s77
      %s78 = sphi 0, %s75
      %s79 = sphi 0, %s78
      %s95 = sphi 0, %s79
      %s99 = sphi 0, %s99
      %s101 = sphi 0, %s99
      %s102 = sphi 0, %s101
      %s116 = sphi 0, %s102
      %s120 = sphi 0, %s120
      %s122 = sphi 0, %s120
      %s123 = sphi 0, %s122
      %s137 = sphi 0, %s123
      %s141 = sphi 0, %s141
      %s143 = sphi 0, %s141
      %s144 = sphi 0, %s143
      %s158 = sphi 0, %s144
      %s162 = sphi 0, %s162
      %s164 = sphi 0, %s162
      %s165 = sphi 0, %s164
      %s179 = sphi 0, %s165
      %s183 = sphi 0, %s183
      %s185 = sphi 0, %s183
      %s186 = sphi 0, %s185
      %s200 = sphi 0, %s186
      %s204 = sphi 0, %s204
      %s206 = sphi 0, %s204
      %s207 = sphi 0, %s206
      %s221 = sphi 0, %s207
      %s229 = sphi 0, %s231
      %s232 = sphi 0, %s229
      %s233 = sphi 0, %s232
      %s249 = sphi 0, %s233
    $region4: #{tpu_custom_call.1} parent=1 // loop_header_branch
      %20 = sbr.rel (%p18) target = $region8
    $region5: #{tpu_custom_call.1} parent=1 // loop_body
      %s22 = ssub.s32 %s17, 1
      %s23 = ssub.s32 %s17, 2
      %s30 = sadd.s32 1, %s25
      %p31 = scmp.ge.s32.totalorder %s30, 2
      %s32 = scalar_select %p31, 0, %s30
      %s33 = sadd.s32 1, %s24
      %s34 = scalar_select %p31, %s33, %s24
      %p35 = scmp.ge.s32.totalorder %s34, 2
      %s36 = scalar_select %p35, 0, %s34
      %s37 = ssub.s32 %s24, %s36
      %s38 = ssub.s32 %s25, %s32
      %s39 = sor.u32 %s37, %s38
      %p40 = scmp.eq.s32.totalorder %s39, 0
      %s42 = sadd.s32 %s41, 1
      %s43 = scalar_select %p40, %s41, %s42
      %p46 = pneg %p40
      %p47 = scmp.eq.s32.totalorder %s17, 3
      %p48 = por %p46, %p47
      %p49 = scmp.ne.s32.totalorder %s41, %s44
      %p50 = scmp.eq.s32.totalorder %s17, 0
      %p51 = por %p49, %p50
      %p52 = scmp.ne.s32.totalorder %s41, %s44
      %p53 = scmp.eq.s32.totalorder %s22, 3
      %p54 = por %p52, %p53
      %p55 = scmp.ne.s32.totalorder %s44, %s45
      %p56 = scmp.eq.s32.totalorder %s22, 0
      %p57 = por %p55, %p56
      %p58 = scmp.ne.s32.totalorder %s44, %s45
      %p59 = scmp.eq.s32.totalorder %s23, 3
      %p60 = por %p58, %p59
      %p62 = scmp.ne.s32.totalorder %s45, %s61
      %p63 = scmp.eq.s32.totalorder %s23, 0
      %p64 = por %p62, %p63
      %s65 = sadd.s32 %s25, 1
      %p66 = scmp.lt.s32.totalorder %s65, 1
      %s67 = scalar_select %p66, %s65, 1
      %s68 = sadd.s32 %s32, 1
      %p69 = scmp.lt.s32.totalorder %s68, 1
      %s70 = scalar_select %p69, %s68, 1
      %s71 = ssub.s32 %s24, %s36
      %s72 = ssub.s32 %s67, %s70
      %s73 = sor.u32 %s71, %s72
      %p74 = scmp.eq.s32.totalorder %s73, 0
      %s76 = sadd.s32 %s75, 1
      %s77 = scalar_select %p74, %s75, %s76
      %p80 = pneg %p74
      %p81 = scmp.eq.s32.totalorder %s17, 3
      %p82 = por %p80, %p81
      %p83 = scmp.ne.s32.totalorder %s75, %s78
      %p84 = scmp.eq.s32.totalorder %s17, 0
      %p85 = por %p83, %p84
      %p86 = scmp.ne.s32.totalorder %s75, %s78
      %p87 = scmp.eq.s32.totalorder %s22, 3
      %p88 = por %p86, %p87
      %p89 = scmp.ne.s32.totalorder %s78, %s79
      %p90 = scmp.eq.s32.totalorder %s22, 0
      %p91 = por %p89, %p90
      %p92 = scmp.ne.s32.totalorder %s78, %s79
      %p93 = scmp.eq.s32.totalorder %s23, 3
      %p94 = por %p92, %p93
      %p96 = scmp.ne.s32.totalorder %s79, %s95
      %p97 = scmp.eq.s32.totalorder %s23, 0
      %p98 = por %p96, %p97
      %s100 = sadd.s32 %s99, 1
      %p103 = scmp.eq.s32.totalorder %s17, 3
      %p104 = scmp.ne.s32.totalorder %s99, %s101
      %p105 = scmp.eq.s32.totalorder %s17, 0
      %p106 = por %p104, %p105
      %p107 = scmp.ne.s32.totalorder %s99, %s101
      %p108 = scmp.eq.s32.totalorder %s22, 3
      %p109 = por %p107, %p108
      %p110 = scmp.ne.s32.totalorder %s101, %s102
      %p111 = scmp.eq.s32.totalorder %s22, 0
      %p112 = por %p110, %p111
      %p113 = scmp.ne.s32.totalorder %s101, %s102
      %p114 = scmp.eq.s32.totalorder %s23, 3
      %p115 = por %p113, %p114
      %p117 = scmp.ne.s32.totalorder %s102, %s116
      %p118 = scmp.eq.s32.totalorder %s23, 0
      %p119 = por %p117, %p118
      %s121 = sadd.s32 %s120, 1
      %p124 = scmp.eq.s32.totalorder %s17, 3
      %p125 = scmp.ne.s32.totalorder %s120, %s122
      %p126 = scmp.eq.s32.totalorder %s17, 0
      %p127 = por %p125, %p126
      %p128 = scmp.ne.s32.totalorder %s120, %s122
      %p129 = scmp.eq.s32.totalorder %s22, 3
      %p130 = por %p128, %p129
      %p131 = scmp.ne.s32.totalorder %s122, %s123
      %p132 = scmp.eq.s32.totalorder %s22, 0
      %p133 = por %p131, %p132
      %p134 = scmp.ne.s32.totalorder %s122, %s123
      %p135 = scmp.eq.s32.totalorder %s23, 3
      %p136 = por %p134, %p135
      %p138 = scmp.ne.s32.totalorder %s123, %s137
      %p139 = scmp.eq.s32.totalorder %s23, 0
      %p140 = por %p138, %p139
      %s142 = sadd.s32 %s141, 1
      %p145 = scmp.eq.s32.totalorder %s17, 3
      %p146 = scmp.ne.s32.totalorder %s141, %s143
      %p147 = scmp.eq.s32.totalorder %s17, 0
      %p148 = por %p146, %p147
      %p149 = scmp.ne.s32.totalorder %s141, %s143
      %p150 = scmp.eq.s32.totalorder %s22, 3
      %p151 = por %p149, %p150
      %p152 = scmp.ne.s32.totalorder %s143, %s144
      %p153 = scmp.eq.s32.totalorder %s22, 0
      %p154 = por %p152, %p153
      %p155 = scmp.ne.s32.totalorder %s143, %s144
      %p156 = scmp.eq.s32.totalorder %s23, 3
      %p157 = por %p155, %p156
      %p159 = scmp.ne.s32.totalorder %s144, %s158
      %p160 = scmp.eq.s32.totalorder %s23, 0
      %p161 = por %p159, %p160
      %s163 = sadd.s32 %s162, 1
      %p166 = scmp.eq.s32.totalorder %s17, 3
      %p167 = scmp.ne.s32.totalorder %s162, %s164
      %p168 = scmp.eq.s32.totalorder %s17, 0
      %p169 = por %p167, %p168
      %p170 = scmp.ne.s32.totalorder %s162, %s164
      %p171 = scmp.eq.s32.totalorder %s22, 3
      %p172 = por %p170, %p171
      %p173 = scmp.ne.s32.totalorder %s164, %s165
      %p174 = scmp.eq.s32.totalorder %s22, 0
      %p175 = por %p173, %p174
      %p176 = scmp.ne.s32.totalorder %s164, %s165
      %p177 = scmp.eq.s32.totalorder %s23, 3
      %p178 = por %p176, %p177
      %p180 = scmp.ne.s32.totalorder %s165, %s179
      %p181 = scmp.eq.s32.totalorder %s23, 0
      %p182 = por %p180, %p181
      %s184 = sadd.s32 %s183, 1
      %p187 = scmp.eq.s32.totalorder %s17, 3
      %p188 = scmp.ne.s32.totalorder %s183, %s185
      %p189 = scmp.eq.s32.totalorder %s17, 0
      %p190 = por %p188, %p189
      %p191 = scmp.ne.s32.totalorder %s183, %s185
      %p192 = scmp.eq.s32.totalorder %s22, 3
      %p193 = por %p191, %p192
      %p194 = scmp.ne.s32.totalorder %s185, %s186
      %p195 = scmp.eq.s32.totalorder %s22, 0
      %p196 = por %p194, %p195
      %p197 = scmp.ne.s32.totalorder %s185, %s186
      %p198 = scmp.eq.s32.totalorder %s23, 3
      %p199 = por %p197, %p198
      %p201 = scmp.ne.s32.totalorder %s186, %s200
      %p202 = scmp.eq.s32.totalorder %s23, 0
      %p203 = por %p201, %p202
      %s205 = sadd.s32 %s204, 1
      %p208 = scmp.eq.s32.totalorder %s17, 3
      %p209 = scmp.ne.s32.totalorder %s204, %s206
      %p210 = scmp.eq.s32.totalorder %s17, 0
      %p211 = por %p209, %p210
      %p212 = scmp.ne.s32.totalorder %s204, %s206
      %p213 = scmp.eq.s32.totalorder %s22, 3
      %p214 = por %p212, %p213
      %p215 = scmp.ne.s32.totalorder %s206, %s207
      %p216 = scmp.eq.s32.totalorder %s22, 0
      %p217 = por %p215, %p216
      %p218 = scmp.ne.s32.totalorder %s206, %s207
      %p219 = scmp.eq.s32.totalorder %s23, 3
      %p220 = por %p218, %p219
      %p222 = scmp.ne.s32.totalorder %s207, %s221
      %p223 = scmp.eq.s32.totalorder %s23, 0
      %p224 = por %p222, %p223
      %s225 = ssub.s32 %s24, %s36
      %s226 = ssub.s32 %s25, %s32
      %s227 = sor.u32 %s225, %s226
      %p228 = scmp.eq.s32.totalorder %s227, 0
      %s230 = sadd.s32 %s229, 1
      %s231 = scalar_select %p228, %s229, %s230
      %p234 = pneg %p228
      %p235 = scmp.eq.s32.totalorder %s17, 3
      %p236 = por %p234, %p235
      %p237 = scmp.ne.s32.totalorder %s229, %s232
      %p238 = scmp.eq.s32.totalorder %s17, 0
      %p239 = por %p237, %p238
      %p240 = scmp.ne.s32.totalorder %s229, %s232
      %p241 = scmp.eq.s32.totalorder %s22, 3
      %p242 = por %p240, %p241
      %p243 = scmp.ne.s32.totalorder %s232, %s233
      %p244 = scmp.eq.s32.totalorder %s22, 0
      %p245 = por %p243, %p244
      %p246 = scmp.ne.s32.totalorder %s232, %s233
      %p247 = scmp.eq.s32.totalorder %s23, 3
      %p248 = por %p246, %p247
      %p250 = scmp.ne.s32.totalorder %s233, %s249
      %p251 = scmp.eq.s32.totalorder %s23, 0
      %p252 = por %p250, %p251
      %p253 = scmp.le.s32.totalorder 1, %s17
      %p254 = scmp.lt.s32.totalorder %s17, 5
      %p255 = pnand %p253, %p254
      %p256 = pneg %p255
      // Predicated region
      $region9: #{tpu_custom_call.1} parent=5 // pred_check
        _
      $region10: #{tpu_custom_call.1} parent=5 // pred_check_branch
        %258 = sbr.rel (%p255) target = $region12
      $region11: #{tpu_custom_call.1} parent=5 // pred_region
        %s259 = ssub.s32 %s17, 1
        // Predicated region
        $region13: #{tpu_custom_call.1} parent=11 // pred_check
          %p260 = pneg %p112
        $region14: #{tpu_custom_call.1} parent=11 // pred_check_branch
          %262 = sbr.rel (%p260) target = $region16
        $region15: #{tpu_custom_call.1} parent=11 // pred_region
          _
        $region16: #{tpu_custom_call.1} parent=11 // pred_fallthru
          _
        // Predicated region
        $region17: #{tpu_custom_call.1} parent=11 // pred_check
          %p263 = pneg %p133
        $region18: #{tpu_custom_call.1} parent=11 // pred_check_branch
          %265 = sbr.rel (%p263) target = $region20
        $region19: #{tpu_custom_call.1} parent=11 // pred_region
          _
        $region20: #{tpu_custom_call.1} parent=11 // pred_fallthru
          _
        // Predicated region
        $region21: #{tpu_custom_call.1} parent=11 // pred_check
          %p266 = pneg %p154
        $region22: #{tpu_custom_call.1} parent=11 // pred_check_branch
          %268 = sbr.rel (%p266) target = $region24
        $region23: #{tpu_custom_call.1} parent=11 // pred_region
          _
        $region24: #{tpu_custom_call.1} parent=11 // pred_fallthru
          _
        // Predicated region
        $region25: #{tpu_custom_call.1} parent=11 // pred_check
          %p269 = pneg %p175
        $region26: #{tpu_custom_call.1} parent=11 // pred_check_branch
          %271 = sbr.rel (%p269) target = $region28
        $region27: #{tpu_custom_call.1} parent=11 // pred_region
          _
        $region28: #{tpu_custom_call.1} parent=11 // pred_fallthru
          _
        // Predicated region
        $region29: #{tpu_custom_call.1} parent=11 // pred_check
          %p272 = pneg %p196
        $region30: #{tpu_custom_call.1} parent=11 // pred_check_branch
          %274 = sbr.rel (%p272) target = $region32
        $region31: #{tpu_custom_call.1} parent=11 // pred_region
          _
        $region32: #{tpu_custom_call.1} parent=11 // pred_fallthru
          _
        // Predicated region
        $region33: #{tpu_custom_call.1} parent=11 // pred_check
          %p275 = pneg %p217
        $region34: #{tpu_custom_call.1} parent=11 // pred_check_branch
          %277 = sbr.rel (%p275) target = $region36
        $region35: #{tpu_custom_call.1} parent=11 // pred_region
          _
        $region36: #{tpu_custom_call.1} parent=11 // pred_fallthru
          _
      $region12: #{tpu_custom_call.1} parent=5 // pred_fallthru
        _
      %p278 = scmp.lt.s32.totalorder %s17, 4
      // Predicated region
      $region37: #{tpu_custom_call.1} parent=5 // pred_check
        %p279 = pneg %p278
      $region38: #{tpu_custom_call.1} parent=5 // pred_check_branch
        %281 = sbr.rel (%p279) target = $region40
      $region39: #{tpu_custom_call.1} parent=5 // pred_region
        // Predicated region
        $region41: #{tpu_custom_call.1} parent=39 // pred_check
          %p282 = pneg %p51
        $region42: #{tpu_custom_call.1} parent=39 // pred_check_branch
          %284 = sbr.rel (%p282) target = $region44
        $region43: #{tpu_custom_call.1} parent=39 // pred_region
          %p285 = scmp.lt.s32.totalorder %s24, 1
          %s286 = scalar_select %p285, %s24, 1
          %p287 = scmp.lt.s32.totalorder %s25, 1
          %s288 = scalar_select %p287, %s25, 1
          %s289 = smul.addr %s286, 2
          %s290 = sadd.s32 %s288, %s289
          %s291 = smul.addr %s290, 2
          %s292 = scalar_lea.vmem %s0, %s291
        $region44: #{tpu_custom_call.1} parent=39 // pred_fallthru
          _
        // Predicated region
        $region45: #{tpu_custom_call.1} parent=39 // pred_check
          %p293 = pneg %p85
        $region46: #{tpu_custom_call.1} parent=39 // pred_check_branch
          %295 = sbr.rel (%p293) target = $region48
        $region47: #{tpu_custom_call.1} parent=39 // pred_region
          %s296 = sadd.s32 %s25, 1
          %p297 = scmp.lt.s32.totalorder %s296, 1
          %s298 = scalar_select %p297, %s296, 1
          %p299 = scmp.lt.s32.totalorder %s24, 1
          %s300 = scalar_select %p299, %s24, 1
          %p301 = scmp.lt.s32.totalorder %s298, 1
          %s302 = scalar_select %p301, %s298, 1
          %s303 = smul.addr %s300, 2
          %s304 = sadd.s32 %s302, %s303
          %s305 = smul.addr %s304, 2
          %s306 = scalar_lea.vmem %s1, %s305
          %s307 = sadd.s32 %s25, 1
          %p308 = scmp.lt.s32.totalorder %s307, 1
          %s309 = scalar_select %p308, %s307, 1
        $region48: #{tpu_custom_call.1} parent=39 // pred_fallthru
          _
      $region40: #{tpu_custom_call.1} parent=5 // pred_fallthru
        _
      %p310 = scmp.le.s32.totalorder 1, %s17
      %p311 = scmp.lt.s32.totalorder %s17, 5
      %p312 = pnand %p310, %p311
      %p313 = pneg %p312
      // Predicated region
      $region49: #{tpu_custom_call.1} parent=5 // pred_check
        _
      $region50: #{tpu_custom_call.1} parent=5 // pred_check_branch
        %315 = sbr.rel (%p312) target = $region52
      $region51: #{tpu_custom_call.1} parent=5 // pred_region
        %s316 = ssub.s32 %s17, 1
        %p317 = scmp.lt.s32.totalorder %s26, 1
        %s318 = scalar_select %p317, %s26, 1
        %p319 = scmp.lt.s32.totalorder %s27, 1
        %s320 = scalar_select %p319, %s27, 1
        %s321 = smul.addr %s318, 2
        %s322 = sadd.s32 %s320, %s321
        %s323 = smul.addr %s322, 2
        %s324 = scalar_lea.vmem %s0, %s323
        %p325 = pneg %p57
        %p326 = pneg %p54
        %s327 = sadd.s32 %s27, 1
        %p328 = scmp.lt.s32.totalorder %s327, 1
        %s329 = scalar_select %p328, %s327, 1
        %p330 = scmp.lt.s32.totalorder %s26, 1
        %s331 = scalar_select %p330, %s26, 1
        %p332 = scmp.lt.s32.totalorder %s329, 1
        %s333 = scalar_select %p332, %s329, 1
        %s334 = smul.addr %s331, 2
        %s335 = sadd.s32 %s333, %s334
        %s336 = smul.addr %s335, 2
        %s337 = scalar_lea.vmem %s1, %s336
        %p338 = pneg %p91
        %p339 = pneg %p88
        %p340 = pneg %p112
        %p341 = pneg %p109
        %p342 = pneg %p133
        %p343 = pneg %p130
        %p344 = pneg %p154
        %p345 = pneg %p151
        %p346 = pneg %p175
        %p347 = pneg %p172
        %p348 = pneg %p196
        %p349 = pneg %p193
        %p350 = pneg %p217
        %p351 = pneg %p214
        %p352 = pneg %p245
        %p353 = pneg %p242
        %s354 = sand.u32 %s232, 1
        %s355 = scalar_lea.sflag [#allocation3], %s354
        %s356 = sand.u32 %s232, 1
        %s357 = smul.addr %s356, 4
        %s358 = scalar_lea.vmem [#allocation2], %s357
        %p359 = scmp.lt.s32.totalorder %s26, 1
        %s360 = scalar_select %p359, %s26, 1
        %p361 = scmp.lt.s32.totalorder %s27, 1
        %s362 = scalar_select %p361, %s27, 1
        %s363 = smul.addr %s360, 2
        %s364 = sadd.s32 %s362, %s363
        %s365 = smul.addr %s364, 2
        %s366 = scalar_lea.vmem %s0, %s365
        %s367 = sadd.s32 %s27, 1
        %p368 = scmp.lt.s32.totalorder %s367, 1
        %s369 = scalar_select %p368, %s367, 1
        %p370 = scmp.lt.s32.totalorder %s26, 1
        %s371 = scalar_select %p370, %s26, 1
        %p372 = scmp.lt.s32.totalorder %s369, 1
        %s373 = scalar_select %p372, %s369, 1
        %s374 = smul.addr %s371, 2
        %s375 = sadd.s32 %s373, %s374
        %s376 = smul.addr %s375, 2
        %s377 = scalar_lea.vmem %s1, %s376
        %s378 = sadd.s32 %s27, 1
        %p379 = scmp.lt.s32.totalorder %s378, 1
        %s380 = scalar_select %p379, %s378, 1
        %p382 = scmp.eq.s32.totalorder %s27, 1
        // Predicated region
        $region53: #{tpu_custom_call.1} parent=51 // pred_check
          %p383 = pneg %p382
        $region54: #{tpu_custom_call.1} parent=51 // pred_check_branch
          %385 = sbr.rel (%p383) target = $region56
        $region55: #{tpu_custom_call.1} parent=51 // pred_region
          %386 = vst [vmem:[%s358] sm:$0xf] 0
        $region56: #{tpu_custom_call.1} parent=51 // pred_fallthru
          _
        %p387 = scmp.lt.s32.totalorder %s27, 1
        // Predicated region
        $region57: #{tpu_custom_call.1} parent=51 // pred_check
          %p388 = pneg %p387
        $region58: #{tpu_custom_call.1} parent=51 // pred_check_branch
          %390 = sbr.rel (%p388) target = $region60
        $region59: #{tpu_custom_call.1} parent=51 // pred_region
          %s391 = smul.u32 %s27, 128
          %v392 = vld [vmem:[%s3] sm:$0xff]
          %v393 = vld [vmem:[%s5] sm:$0xff]
          %v394 = vld [vmem:[%s366] sm:$0x3]
          %v395 = vld [vmem:[%s377] sm:$0x3]
          %v396 = vld [vmem:[%s2] sm:$0xf]
          %s397 = scalar_lea.vmem %s2, 4
          %v398 = vld [vmem:[%s397] sm:$0xf]
          %401 = vrot.lane.b32.xlu0 %v394, 127
          %v402 = vpop.permute.xlu0 %401
          %403 = vrot.lane.b32.xlu0 %v395, 127
          %v404 = vpop.permute.xlu0 %403
          %vm405 = vcmask 1039360
          %v406 = vsel %vm405, %v402, %v404
          %vm407 = vcmask 31744
          %v409 = vsel %vm407, %v398, 0
          %vm411 = vcmask 1041408
          %v413 = vsel %vm411, %v406, 0
          %v416 = vsel %vm411, %v404, 0
          %418 = vmatprep.subr.bf16.mxu0 %v416
          %419 = vmatpush1.bf16.msra.mxu0 %v413
          %420 = vmatprep.subr.bf16.mxu0 0
          %421 = vmatpush1.bf16.msra.mxu0 0
          %422 = vmatprep.subr.bf16.mxu0 0
          %423 = vmatpush1.bf16.msra.mxu0 0
          %424 = vmatprep.subr.bf16.mxu0 0
          %425 = vmatpush1.bf16.msra.mxu0 0
          %426 = vmatprep.subr.bf16.mxu0 0
          %427 = vmatpush1.bf16.msra.mxu0 0
          %428 = vmatprep.subr.bf16.mxu0 0
          %429 = vmatpush1.bf16.msra.mxu0 0
          %430 = vmatprep.subr.bf16.mxu0 0
          %431 = vmatpush1.bf16.msra.mxu0 0
          %432 = vmatprep.subr.bf16.mxu0 0
          %433 = vmatpush1.bf16.msra.mxu0 0
          %434 = vmatprep.subr.bf16.mxu0 0
          %435 = vmatpush1.bf16.msra.mxu0 0
          %436 = vmatprep.subr.bf16.mxu0 0
          %437 = vmatpush1.bf16.msra.mxu0 0
          %438 = vmatprep.subr.bf16.mxu0 0
          %439 = vmatpush1.bf16.msra.mxu0 0
          %440 = vmatprep.subr.bf16.mxu0 0
          %441 = vmatpush1.bf16.msra.mxu0 0
          %442 = vmatprep.subr.bf16.mxu0 0
          %443 = vmatpush1.bf16.msra.mxu0 0
          %444 = vmatprep.subr.bf16.mxu0 0
          %445 = vmatpush1.bf16.msra.mxu0 0
          %446 = vmatprep.subr.bf16.mxu0 0
          %447 = vmatpush1.bf16.msra.mxu0 0
          %448 = vmatprep.subr.bf16.mxu0 0
          %449 = vmatpush1.bf16.msra.mxu0 0
          %450 = vmatprep.mubr.bf16.mxu0 0
          %451 = vmatmul.mubr.bf16.gmra.mrb[0].mxu0 %v409
          %v452 = vpop.f32.mrb[0].mxu0
          %v453 = vadd.f32 0.0, %v452
          %v454 = vpop.f32.mrb[0].mxu0
          %v455 = vadd.f32 0.0, %v454
          %v456 = vpop.f32.mrb[0].mxu0
          %v457 = vpop.f32.mrb[0].mxu0
          %458 = vdwg.mxu0
          %v460 = vsel %vm407, %v396, 0
          %v463 = vsel %vm411, %v394, 0
          %v466 = vsel %vm411, %v395, 0
          %468 = vmatprep.subr.bf16.mxu0 %v466
          %469 = vmatpush1.bf16.msra.mxu0 %v463
          %470 = vmatprep.subr.bf16.mxu0 0
          %471 = vmatpush1.bf16.msra.mxu0 0
          %472 = vmatprep.subr.bf16.mxu0 0
          %473 = vmatpush1.bf16.msra.mxu0 0
          %474 = vmatprep.subr.bf16.mxu0 0
          %475 = vmatpush1.bf16.msra.mxu0 0
          %476 = vmatprep.subr.bf16.mxu0 0
          %477 = vmatpush1.bf16.msra.mxu0 0
          %478 = vmatprep.subr.bf16.mxu0 0
          %479 = vmatpush1.bf16.msra.mxu0 0
          %480 = vmatprep.subr.bf16.mxu0 0
          %481 = vmatpush1.bf16.msra.mxu0 0
          %482 = vmatprep.subr.bf16.mxu0 0
          %483 = vmatpush1.bf16.msra.mxu0 0
          %484 = vmatprep.subr.bf16.mxu0 0
          %485 = vmatpush1.bf16.msra.mxu0 0
          %486 = vmatprep.subr.bf16.mxu0 0
          %487 = vmatpush1.bf16.msra.mxu0 0
          %488 = vmatprep.subr.bf16.mxu0 0
          %489 = vmatpush1.bf16.msra.mxu0 0
          %490 = vmatprep.subr.bf16.mxu0 0
          %491 = vmatpush1.bf16.msra.mxu0 0
          %492 = vmatprep.subr.bf16.mxu0 0
          %493 = vmatpush1.bf16.msra.mxu0 0
          %494 = vmatprep.subr.bf16.mxu0 0
          %495 = vmatpush1.bf16.msra.mxu0 0
          %496 = vmatprep.subr.bf16.mxu0 0
          %497 = vmatpush1.bf16.msra.mxu0 0
          %498 = vmatprep.subr.bf16.mxu0 0
          %499 = vmatpush1.bf16.msra.mxu0 0
          %500 = vmatprep.mubr.bf16.mxu0 0
          %501 = vmatmul.mubr.bf16.gmra.mrb[0].mxu0 %v460
          %v502 = vpop.f32.mrb[0].mxu0
          %v503 = vadd.f32 %v453, %v502
          %v504 = vpop.f32.mrb[0].mxu0
          %v505 = vadd.f32 %v455, %v504
          %v506 = vpop.f32.mrb[0].mxu0
          %v507 = vpop.f32.mrb[0].mxu0
          %508 = vdwg.mxu0
          %510 = vset.pattern.permute.xlu0 0
          %511 = vperm.xlu0 %510, %v392
          %v512 = vpop.permute.xlu0 %511
          %v514 = vadd.f32 %v503, %v512
          %v515 = vadd.f32 %v505, %v512
          %v516 = vmax.f32 %v514, 0.0
          %v517 = vmax.f32 %v515, 0.0
          %v518 = vlaneseq
          %v519 = vand.u32 %v518, 127
          %v520 = vadd.s32 %v519, 128
          %v521 = vstv %s391
          %v522 = vadd.s32 %v521, %v519
          %v523 = vadd.s32 %v521, %v520
          %vm524 = vcmp.lt.s32.totalorder %v522, 16
          %vm525 = vcmp.lt.s32.totalorder %v523, 16
          %v526 = vsel %vm524, %v516, 0.0
          %v527 = vsel %vm525, %v517, 0.0
          %v528 = vpack.c.bf16 %v526, %v526
          %v529 = vpack.c.bf16 %v527, %v527
          %v530 = vld [vmem:[%s4] sm:$0xf]
          %s531 = scalar_lea.vmem %s4, 4
          %v532 = vld [vmem:[%s531] sm:$0xf]
          %535 = vrot.lane.b32.xlu0 %v528, 127
          %v536 = vpop.permute.xlu0 %535
          %537 = vrot.lane.b32.xlu0 %v529, 127
          %v538 = vpop.permute.xlu0 %537
          %v539 = vsel %vm405, %v536, %v538
          %vm540 = vcmask 64512
          %v542 = vsel %vm540, %v532, 0
          %vm544 = vcmask 1043456
          %v546 = vsel %vm544, %v539, 0
          %548 = vmatprep.subr.bf16.mxu0 0
          %549 = vmatpush1.bf16.msra.mxu0 %v546
          %550 = vmatprep.subr.bf16.mxu0 0
          %551 = vmatpush1.bf16.msra.mxu0 0
          %552 = vmatprep.subr.bf16.mxu0 0
          %553 = vmatpush1.bf16.msra.mxu0 0
          %554 = vmatprep.subr.bf16.mxu0 0
          %555 = vmatpush1.bf16.msra.mxu0 0
          %556 = vmatprep.subr.bf16.mxu0 0
          %557 = vmatpush1.bf16.msra.mxu0 0
          %558 = vmatprep.subr.bf16.mxu0 0
          %559 = vmatpush1.bf16.msra.mxu0 0
          %560 = vmatprep.subr.bf16.mxu0 0
          %561 = vmatpush1.bf16.msra.mxu0 0
          %562 = vmatprep.subr.bf16.mxu0 0
          %563 = vmatpush1.bf16.msra.mxu0 0
          %564 = vmatprep.subr.bf16.mxu0 0
          %565 = vmatpush1.bf16.msra.mxu0 0
          %566 = vmatprep.subr.bf16.mxu0 0
          %567 = vmatpush1.bf16.msra.mxu0 0
          %568 = vmatprep.subr.bf16.mxu0 0
          %569 = vmatpush1.bf16.msra.mxu0 0
          %570 = vmatprep.subr.bf16.mxu0 0
          %571 = vmatpush1.bf16.msra.mxu0 0
          %572 = vmatprep.subr.bf16.mxu0 0
          %573 = vmatpush1.bf16.msra.mxu0 0
          %574 = vmatprep.subr.bf16.mxu0 0
          %575 = vmatpush1.bf16.msra.mxu0 0
          %576 = vmatprep.subr.bf16.mxu0 0
          %577 = vmatpush1.bf16.msra.mxu0 0
          %578 = vmatprep.subr.bf16.mxu0 0
          %579 = vmatpush1.bf16.msra.mxu0 0
          %580 = vmatprep.mubr.bf16.mxu0 0
          %581 = vmatmul.mubr.bf16.gmra.mrb[0].mxu0 %v542
          %v582 = vpop.f32.mrb[0].mxu0
          %v583 = vadd.f32 0.0, %v582
          %v584 = vpop.f32.mrb[0].mxu0
          %v585 = vpop.f32.mrb[0].mxu0
          %v586 = vpop.f32.mrb[0].mxu0
          %587 = vdwg.mxu0
          %v589 = vsel %vm540, %v530, 0
          %v592 = vsel %vm544, %v528, 0
          %594 = vmatprep.subr.bf16.mxu0 0
          %595 = vmatpush1.bf16.msra.mxu0 %v592
          %596 = vmatprep.subr.bf16.mxu0 0
          %597 = vmatpush1.bf16.msra.mxu0 0
          %598 = vmatprep.subr.bf16.mxu0 0
          %599 = vmatpush1.bf16.msra.mxu0 0
          %600 = vmatprep.subr.bf16.mxu0 0
          %601 = vmatpush1.bf16.msra.mxu0 0
          %602 = vmatprep.subr.bf16.mxu0 0
          %603 = vmatpush1.bf16.msra.mxu0 0
          %604 = vmatprep.subr.bf16.mxu0 0
          %605 = vmatpush1.bf16.msra.mxu0 0
          %606 = vmatprep.subr.bf16.mxu0 0
          %607 = vmatpush1.bf16.msra.mxu0 0
          %608 = vmatprep.subr.bf16.mxu0 0
          %609 = vmatpush1.bf16.msra.mxu0 0
          %610 = vmatprep.subr.bf16.mxu0 0
          %611 = vmatpush1.bf16.msra.mxu0 0
          %612 = vmatprep.subr.bf16.mxu0 0
          %613 = vmatpush1.bf16.msra.mxu0 0
          %614 = vmatprep.subr.bf16.mxu0 0
          %615 = vmatpush1.bf16.msra.mxu0 0
          %616 = vmatprep.subr.bf16.mxu0 0
          %617 = vmatpush1.bf16.msra.mxu0 0
          %618 = vmatprep.subr.bf16.mxu0 0
          %619 = vmatpush1.bf16.msra.mxu0 0
          %620 = vmatprep.subr.bf16.mxu0 0
          %621 = vmatpush1.bf16.msra.mxu0 0
          %622 = vmatprep.subr.bf16.mxu0 0
          %623 = vmatpush1.bf16.msra.mxu0 0
          %624 = vmatprep.subr.bf16.mxu0 0
          %625 = vmatpush1.bf16.msra.mxu0 0
          %626 = vmatprep.mubr.bf16.mxu0 0
          %627 = vmatmul.mubr.bf16.gmra.mrb[0].mxu0 %v589
          %v628 = vpop.f32.mrb[0].mxu0
          %v629 = vadd.f32 %v583, %v628
          %v630 = vpop.f32.mrb[0].mxu0
          %v631 = vpop.f32.mrb[0].mxu0
          %v632 = vpop.f32.mrb[0].mxu0
          %633 = vdwg.mxu0
          %635 = vset.pattern.permute.xlu0 0
          %636 = vperm.xlu0 %635, %v393
          %v637 = vpop.permute.xlu0 %636
          %v639 = vadd.f32 %v629, %v637
          %v640 = vmax.f32 %v639, 0.0
          %v641 = vld [vmem:[%s6] sm:$0xf]
          %v642 = vld [vmem:[%s7] sm:$0xff]
          %644 = vset.pattern.permute.xlu0 0
          %645 = vperm.xlu0 %644, %v642
          %v646 = vpop.permute.xlu0 %645
          %v649 = vsel %vm407, %v641, 0
          %651 = vmatprep.subr.bf16.mxu0 0
          %652 = vmatpush1.bf16.msra.mxu0 %v463
          %653 = vmatprep.subr.bf16.mxu0 0
          %654 = vmatpush1.bf16.msra.mxu0 0
          %655 = vmatprep.subr.bf16.mxu0 0
          %656 = vmatpush1.bf16.msra.mxu0 0
          %657 = vmatprep.subr.bf16.mxu0 0
          %658 = vmatpush1.bf16.msra.mxu0 0
          %659 = vmatprep.subr.bf16.mxu0 0
          %660 = vmatpush1.bf16.msra.mxu0 0
          %661 = vmatprep.subr.bf16.mxu0 0
          %662 = vmatpush1.bf16.msra.mxu0 0
          %663 = vmatprep.subr.bf16.mxu0 0
          %664 = vmatpush1.bf16.msra.mxu0 0
          %665 = vmatprep.subr.bf16.mxu0 0
          %666 = vmatpush1.bf16.msra.mxu0 0
          %667 = vmatprep.subr.bf16.mxu0 0
          %668 = vmatpush1.bf16.msra.mxu0 0
          %669 = vmatprep.subr.bf16.mxu0 0
          %670 = vmatpush1.bf16.msra.mxu0 0
          %671 = vmatprep.subr.bf16.mxu0 0
          %672 = vmatpush1.bf16.msra.mxu0 0
          %673 = vmatprep.subr.bf16.mxu0 0
          %674 = vmatpush1.bf16.msra.mxu0 0
          %675 = vmatprep.subr.bf16.mxu0 0
          %676 = vmatpush1.bf16.msra.mxu0 0
          %677 = vmatprep.subr.bf16.mxu0 0
          %678 = vmatpush1.bf16.msra.mxu0 0
          %679 = vmatprep.subr.bf16.mxu0 0
          %680 = vmatpush1.bf16.msra.mxu0 0
          %681 = vmatprep.subr.bf16.mxu0 0
          %682 = vmatpush1.bf16.msra.mxu0 0
          %683 = vmatprep.mubr.bf16.mxu0 0
          %684 = vmatmul.mubr.bf16.gmra.mrb[0].mxu0 %v649
          %v685 = vpop.f32.mrb[0].mxu0
          %v686 = vadd.f32 %v646, %v685
          %v687 = vpop.f32.mrb[0].mxu0
          %v688 = vpop.f32.mrb[0].mxu0
          %v689 = vpop.f32.mrb[0].mxu0
          %690 = vdwg.mxu0
          %v691 = vadd.f32 %v640, %v686
          %v692 = vmax.f32 %v691, 0.0
          %v693 = vsel %vm524, %v692, 0.0
          %v694 = vpack.c.bf16 %v693, %v693
          %695 = vst [vmem:[%s358] sm:$0xf] %v694
        $region60: #{tpu_custom_call.1} parent=51 // pred_fallthru
          _
        %s696 = sand.u32 %s232, 1
        %s697 = scalar_lea.sflag [#allocation3], %s696
        %s698 = sand.u32 %s232, 1
        %s699 = smul.addr %s698, 4
        %s700 = scalar_lea.vmem [#allocation2], %s699
        // Predicated region
        $region61: #{tpu_custom_call.1} parent=51 // pred_check
          %p701 = pneg %p242
        $region62: #{tpu_custom_call.1} parent=51 // pred_check_branch
          %703 = sbr.rel (%p701) target = $region64
        $region63: #{tpu_custom_call.1} parent=51 // pred_region
          %s705 = ssub.s32 64, 64
          %706 = vsyncadd %s697, %s705
          %s707 = smul.addr %s26, 2
          %s708 = sadd.s32 %s27, %s707
          %s709 = smul.addr %s708, 64
          %s710 = scalar_lea.hbm %s8, %s709
          %s712 = sshll.u32 %s700, 4
          %s713 = int_to_ptr.vmem [resolvable:$true] %s712
          %715 = dma.vmem_to_hbm [thread:$0]  %s713, 64, %s710, %s697
        $region64: #{tpu_custom_call.1} parent=51 // pred_fallthru
          _
      $region52: #{tpu_custom_call.1} parent=5 // pred_fallthru
        _
      %p716 = scmp.le.s32.totalorder 2, %s17
      // Predicated region
      $region65: #{tpu_custom_call.1} parent=5 // pred_check
        %p717 = pneg %p716
      $region66: #{tpu_custom_call.1} parent=5 // pred_check_branch
        %719 = sbr.rel (%p717) target = $region68
      $region67: #{tpu_custom_call.1} parent=5 // pred_region
        %s720 = ssub.s32 %s17, 2
        // Predicated region
        $region69: #{tpu_custom_call.1} parent=67 // pred_check
          %p721 = pneg %p248
        $region70: #{tpu_custom_call.1} parent=67 // pred_check_branch
          %723 = sbr.rel (%p721) target = $region72
        $region71: #{tpu_custom_call.1} parent=67 // pred_region
          %s724 = sand.u32 %s233, 1
          %s725 = scalar_lea.sflag [#allocation3], %s724
          %s726 = sand.u32 %s233, 1
          %s727 = smul.addr %s726, 4
          %s728 = scalar_lea.vmem [#allocation2], %s727
          %729 = dma.done %s725, 64
        $region72: #{tpu_custom_call.1} parent=67 // pred_fallthru
          _
      $region68: #{tpu_custom_call.1} parent=5 // pred_fallthru
        _
    $region6: #{tpu_custom_call.1} parent=1 // loop_footer
      %s21 = sadd.s32 1, %s17
    $region7: #{tpu_custom_call.1} parent=1 // loop_footer_branch
      %16 = sbr.rel target = $region3
    $region8: #{tpu_custom_call.1} parent=1 // loop_exit
      _
    %730 = vsyncpa [#allocation3], 1
    %s731 = scalar_lea.sflag [#allocation3], 1
    %732 = vsyncpa %s731, 1

</llo_original>
